<compile_context>
chip_gen: v7x
topology: tpu7x:2x2x1
jax: 0.10.0
libtpu: 0.0.40
codegen_flags: <defaults>
</compile_context>

<pallas_src>
import functools

import jax
import jax.numpy as jnp
from jax import lax
from jax.experimental import pallas as pl
from jax.experimental.pallas import tpu as pltpu

# CFG.dt stand-in (deterministic, in-script).
DT = 0.1

# Folded recurrence constants (Python floats -> immediate splats, no
# re-emitted broadcast_in_dim inside the loop).
_C1 = 1.0 + DT                   # V coefficient
_C2 = DT / 3.0                   # V^3 coefficient
_SA = 1.0 - DT * 0.08 * 0.8      # S  <- SA*S + SB*V + SC
_SB = DT * 0.08
_SC = DT * 0.08 * 0.7

_UNROLL = 8      # time-step unroll factor
_B_BLK = 8       # batch rows per block (f32 sublane count)


def _fh_kernel(z_ref, out_ref, v_sc, s_sc):
    # z_ref, out_ref: (t_blk, B_BLK, L) time-major chunk.
    # v_sc, s_sc:     (B_BLK, L) f32 state persisted across T chunks.
    #
    # Invariant: entering global time row k, (v, s) hold V[k], S[k];
    # we store V[k]/2 and then advance the state with z[k].

    @pl.when(pl.program_id(1) == 0)
    def _init():
        v_sc[...] = jnp.zeros_like(v_sc)
        s_sc[...] = jnp.zeros_like(s_sc)

    t_blk = out_ref.shape[0]
    n_outer = t_blk // _UNROLL

    def body(step, carry):
        v, s = carry
        base = pl.multiple_of(step * _UNROLL, _UNROLL)
        for u in range(_UNROLL):            # unrolled at trace time
            j = base + u
            out_ref[j] = (v * 0.5).astype(out_ref.dtype)   # full (8, L) tile
            z_j = z_ref[j]                                  # full (8, L) tile
            v_new = _C1 * v - _C2 * (v * v * v) + DT * (z_j - s)
            s_new = _SA * s + _SB * v + _SC
            v, s = v_new, s_new
        return v, s

    v_fin, s_fin = lax.fori_loop(0, n_outer, body, (v_sc[...], s_sc[...]))
    v_sc[...] = v_fin
    s_sc[...] = s_fin


@functools.partial(jax.jit, static_argnames=("t_blk_max",))
def fh_forward(z, t_blk_max=256):
    """z: (B, T, L) float32 -> V/2: (B, T, L) float32."""
    z = jnp.asarray(z, jnp.float32)
    B, T, L = z.shape
    U = _UNROLL

    # Pad batch to a multiple of 8 and time to a multiple of the time chunk.
    b_pad = -(-B // _B_BLK) * _B_BLK
    t_ceil = -(-T // U) * U
    t_blk = max(U, (min(t_blk_max, t_ceil) // U) * U)
    t_pad = -(-T // t_blk) * t_blk

    zp = z
    if b_pad != B or t_pad != T:
        zp = jnp.pad(z, ((0, b_pad - B), (0, t_pad - T), (0, 0)))

    # Time-major, batch on sublanes, L on lanes -> aligned (8,128) tile I/O.
    zt = jnp.transpose(zp, (1, 0, 2))                    # (t_pad, b_pad, L)

    grid = (b_pad // _B_BLK, t_pad // t_blk)
    out_t = pl.pallas_call(
        _fh_kernel,
        out_shape=jax.ShapeDtypeStruct((t_pad, b_pad, L), jnp.float32),
        grid_spec=pltpu.PrefetchScalarGridSpec(
            num_scalar_prefetch=0,
            grid=grid,
            in_specs=[pl.BlockSpec((t_blk, _B_BLK, L), lambda b, t: (t, b, 0))],
            out_specs=pl.BlockSpec((t_blk, _B_BLK, L), lambda b, t: (t, b, 0)),
            scratch_shapes=[
                pltpu.VMEM((_B_BLK, L), jnp.float32),   # V state across T chunks
                pltpu.VMEM((_B_BLK, L), jnp.float32),   # S state across T chunks
            ],
        ),
        compiler_params=pltpu.CompilerParams(
            dimension_semantics=("parallel", "arbitrary")),
    )(zt)

    out = jnp.transpose(out_t, (1, 0, 2))                # (b_pad, t_pad, L)
    return out[:B, :T]


def fh_reference(z):
    """Pure-JAX reference mirroring the PyTorch module."""
    B, T, L = z.shape
    dt = jnp.float32(DT)

    def step(carry, z_prev):
        v_prev, s_prev = carry
        v_new = ((1.0 + dt) * v_prev
                 - (dt / 3.0) * v_prev ** 3
                 - dt * s_prev
                 + dt * z_prev)
        s_new = s_prev + dt * 0.08 * (v_prev + 0.7 - 0.8 * s_prev)
        return (v_new, s_new), v_new

    v0 = jnp.zeros((B, L), jnp.float32)
    s0 = jnp.zeros((B, L), jnp.float32)
    # V rows 1..T-1 come from scanning over z rows 0..T-2.
    _, v_rest = lax.scan(step, (v0, s0), jnp.swapaxes(z, 0, 1)[:-1])
    V = jnp.concatenate([v0[None], v_rest], axis=0)      # (T, B, L)
    return jnp.swapaxes(V, 0, 1) / 2.0


if __name__ == "__main__":
    key0, key1 = jax.random.split(jax.random.PRNGKey(0))

    # Case 1: module-typical small shapes.
    B, T, L = 2, 8, 128
    z = jax.random.normal(key0, (B, T, L), dtype=jnp.float32)
    out = jax.block_until_ready(fh_forward(z))
    ref = fh_reference(z)
    assert out.shape == (B, T, L)
    assert jnp.allclose(out, ref, atol=1e-5, rtol=1e-5), "mismatch (case 1)"

    # Case 2: exercises batch padding (B=3 -> 8) and multiple time chunks.
    B2, T2, L2 = 3, 20, 128
    z2 = jax.random.normal(key1, (B2, T2, L2), dtype=jnp.float32)
    out2 = jax.block_until_ready(fh_forward(z2, t_blk_max=8))
    ref2 = fh_reference(z2)
    assert out2.shape == (B2, T2, L2)
    assert jnp.allclose(out2, ref2, atol=1e-5, rtol=1e-5), "mismatch (case 2)"

    print("KERNEL_OK")
</pallas_src>

<mosaic_0001>
module attributes {stable_mosaic.version = 11 : i64} {
  func.func @_fh_kernel(%arg0: i32, %arg1: i32, %arg2: memref<8x8x128xf32, #tpu.memory_space<vmem>>, %arg3: memref<8x8x128xf32, #tpu.memory_space<vmem>>, %arg4: memref<8x128xf32, #tpu.memory_space<vmem>>, %arg5: memref<8x128xf32, #tpu.memory_space<vmem>>) attributes {dimension_semantics = [#tpu.dimension_semantics<parallel>, #tpu.dimension_semantics<arbitrary>], iteration_bounds = array<i64: 1, 1>, scalar_prefetch = 0 : i64, scratch_operands = 2 : i64, tpu.core_type = #tpu.core_type<tc>, window_params = [{transform_indices = @transform_0, window_bounds = array<i64: 8, 8, 128>}, {transform_indices = @transform_1, window_bounds = array<i64: 8, 8, 128>}]} {
    %c0_i32 = arith.constant 0 : i32
    %0 = arith.cmpi eq, %arg1, %c0_i32 : i32
    %1 = arith.extui %0 : i1 to i32
    %c0_i32_0 = arith.constant 0 : i32
    %2 = arith.cmpi ne, %1, %c0_i32_0 : i32
    scf.if %2 {
      %cst_98 = arith.constant 0.000000e+00 : f32
      %233 = vector.broadcast %cst_98 : f32 to vector<8x128xf32>
      %c0_99 = arith.constant 0 : index
      %c0_100 = arith.constant 0 : index
      %234 = vector.load %arg4[%c0_99, %c0_100] : memref<8x128xf32, #tpu.memory_space<vmem>>, vector<8x128xf32>
      tpu.vector_store %arg4[%c0_99, %c0_100], %233 {strides = array<i32>} : memref<8x128xf32, #tpu.memory_space<vmem>>, vector<8x128xf32>,
      %cst_101 = arith.constant 0.000000e+00 : f32
      %235 = vector.broadcast %cst_101 : f32 to vector<8x128xf32>
      %c0_102 = arith.constant 0 : index
      %c0_103 = arith.constant 0 : index
      %236 = vector.load %arg5[%c0_102, %c0_103] : memref<8x128xf32, #tpu.memory_space<vmem>>, vector<8x128xf32>
      tpu.vector_store %arg5[%c0_102, %c0_103], %235 {strides = array<i32>} : memref<8x128xf32, #tpu.memory_space<vmem>>, vector<8x128xf32>,
    } else {
    }
    %c0 = arith.constant 0 : index
    %c0_1 = arith.constant 0 : index
    %3 = vector.load %arg4[%c0, %c0_1] : memref<8x128xf32, #tpu.memory_space<vmem>>, vector<8x128xf32>
    %c0_2 = arith.constant 0 : index
    %c0_3 = arith.constant 0 : index
    %4 = vector.load %arg5[%c0_2, %c0_3] : memref<8x128xf32, #tpu.memory_space<vmem>>, vector<8x128xf32>
    %c0_i32_4 = arith.constant 0 : i32
    %c8_i32 = arith.constant 8 : i32
    %5 = arith.muli %c0_i32_4, %c8_i32 : i32
    %6 = tpu.assume_multiple %5, 8 : i32
    %c0_i32_5 = arith.constant 0 : i32
    %7 = arith.addi %6, %c0_i32_5 : i32
    %cst = arith.constant 5.000000e-01 : f32
    %8 = vector.broadcast %cst : f32 to vector<8x128xf32>
    %9 = arith.mulf %3, %8 : vector<8x128xf32>
    %10 = arith.index_cast %7 : i32 to index
    %c0_6 = arith.constant 0 : index
    %c0_7 = arith.constant 0 : index
    %11 = vector.load %arg3[%10, %c0_6, %c0_7] : memref<8x8x128xf32, #tpu.memory_space<vmem>>, vector<1x8x128xf32>
    %12 = vector.shape_cast %11 : vector<1x8x128xf32> to vector<8x128xf32>
    %13 = vector.shape_cast %9 : vector<8x128xf32> to vector<1x8x128xf32>
    tpu.vector_store %arg3[%10, %c0_6, %c0_7], %13 {strides = array<i32>} : memref<8x8x128xf32, #tpu.memory_space<vmem>>, vector<1x8x128xf32>,
    %14 = arith.index_cast %7 : i32 to index
    %c0_8 = arith.constant 0 : index
    %c0_9 = arith.constant 0 : index
    %15 = vector.load %arg2[%14, %c0_8, %c0_9] : memref<8x8x128xf32, #tpu.memory_space<vmem>>, vector<1x8x128xf32>
    %16 = vector.shape_cast %15 : vector<1x8x128xf32> to vector<8x128xf32>
    %cst_10 = arith.constant 1.100000e+00 : f32
    %17 = vector.broadcast %cst_10 : f32 to vector<8x128xf32>
    %18 = arith.mulf %17, %3 : vector<8x128xf32>
    %19 = arith.mulf %3, %3 : vector<8x128xf32>
    %20 = arith.mulf %19, %3 : vector<8x128xf32>
    %cst_11 = arith.constant 0.0333333351 : f32
    %21 = vector.broadcast %cst_11 : f32 to vector<8x128xf32>
    %22 = arith.mulf %21, %20 : vector<8x128xf32>
    %23 = arith.subf %18, %22 : vector<8x128xf32>
    %24 = arith.subf %16, %4 : vector<8x128xf32>
    %cst_12 = arith.constant 1.000000e-01 : f32
    %25 = vector.broadcast %cst_12 : f32 to vector<8x128xf32>
    %26 = arith.mulf %25, %24 : vector<8x128xf32>
    %27 = arith.addf %23, %26 : vector<8x128xf32>
    %cst_13 = arith.constant 9.936000e-01 : f32
    %28 = vector.broadcast %cst_13 : f32 to vector<8x128xf32>
    %29 = arith.mulf %28, %4 : vector<8x128xf32>
    %cst_14 = arith.constant 8.000000e-03 : f32
    %30 = vector.broadcast %cst_14 : f32 to vector<8x128xf32>
    %31 = arith.mulf %30, %3 : vector<8x128xf32>
    %32 = arith.addf %29, %31 : vector<8x128xf32>
    %cst_15 = arith.constant 5.600000e-03 : f32
    %33 = vector.broadcast %cst_15 : f32 to vector<8x128xf32>
    %34 = arith.addf %32, %33 : vector<8x128xf32>
    %c1_i32 = arith.constant 1 : i32
    %35 = arith.addi %6, %c1_i32 : i32
    %cst_16 = arith.constant 5.000000e-01 : f32
    %36 = vector.broadcast %cst_16 : f32 to vector<8x128xf32>
    %37 = arith.mulf %27, %36 : vector<8x128xf32>
    %38 = arith.index_cast %35 : i32 to index
    %c0_17 = arith.constant 0 : index
    %c0_18 = arith.constant 0 : index
    %39 = vector.load %arg3[%38, %c0_17, %c0_18] : memref<8x8x128xf32, #tpu.memory_space<vmem>>, vector<1x8x128xf32>
    %40 = vector.shape_cast %39 : vector<1x8x128xf32> to vector<8x128xf32>
    %41 = vector.shape_cast %37 : vector<8x128xf32> to vector<1x8x128xf32>
    tpu.vector_store %arg3[%38, %c0_17, %c0_18], %41 {strides = array<i32>} : memref<8x8x128xf32, #tpu.memory_space<vmem>>, vector<1x8x128xf32>,
    %42 = arith.index_cast %35 : i32 to index
    %c0_19 = arith.constant 0 : index
    %c0_20 = arith.constant 0 : index
    %43 = vector.load %arg2[%42, %c0_19, %c0_20] : memref<8x8x128xf32, #tpu.memory_space<vmem>>, vector<1x8x128xf32>
    %44 = vector.shape_cast %43 : vector<1x8x128xf32> to vector<8x128xf32>
    %cst_21 = arith.constant 1.100000e+00 : f32
    %45 = vector.broadcast %cst_21 : f32 to vector<8x128xf32>
    %46 = arith.mulf %45, %27 : vector<8x128xf32>
    %47 = arith.mulf %27, %27 : vector<8x128xf32>
    %48 = arith.mulf %47, %27 : vector<8x128xf32>
    %cst_22 = arith.constant 0.0333333351 : f32
    %49 = vector.broadcast %cst_22 : f32 to vector<8x128xf32>
    %50 = arith.mulf %49, %48 : vector<8x128xf32>
    %51 = arith.subf %46, %50 : vector<8x128xf32>
    %52 = arith.subf %44, %34 : vector<8x128xf32>
    %cst_23 = arith.constant 1.000000e-01 : f32
    %53 = vector.broadcast %cst_23 : f32 to vector<8x128xf32>
    %54 = arith.mulf %53, %52 : vector<8x128xf32>
    %55 = arith.addf %51, %54 : vector<8x128xf32>
    %cst_24 = arith.constant 9.936000e-01 : f32
    %56 = vector.broadcast %cst_24 : f32 to vector<8x128xf32>
    %57 = arith.mulf %56, %34 : vector<8x128xf32>
    %cst_25 = arith.constant 8.000000e-03 : f32
    %58 = vector.broadcast %cst_25 : f32 to vector<8x128xf32>
    %59 = arith.mulf %58, %27 : vector<8x128xf32>
    %60 = arith.addf %57, %59 : vector<8x128xf32>
    %cst_26 = arith.constant 5.600000e-03 : f32
    %61 = vector.broadcast %cst_26 : f32 to vector<8x128xf32>
    %62 = arith.addf %60, %61 : vector<8x128xf32>
    %c2_i32 = arith.constant 2 : i32
    %63 = arith.addi %6, %c2_i32 : i32
    %cst_27 = arith.constant 5.000000e-01 : f32
    %64 = vector.broadcast %cst_27 : f32 to vector<8x128xf32>
    %65 = arith.mulf %55, %64 : vector<8x128xf32>
    %66 = arith.index_cast %63 : i32 to index
    %c0_28 = arith.constant 0 : index
    %c0_29 = arith.constant 0 : index
    %67 = vector.load %arg3[%66, %c0_28, %c0_29] : memref<8x8x128xf32, #tpu.memory_space<vmem>>, vector<1x8x128xf32>
    %68 = vector.shape_cast %67 : vector<1x8x128xf32> to vector<8x128xf32>
    %69 = vector.shape_cast %65 : vector<8x128xf32> to vector<1x8x128xf32>
    tpu.vector_store %arg3[%66, %c0_28, %c0_29], %69 {strides = array<i32>} : memref<8x8x128xf32, #tpu.memory_space<vmem>>, vector<1x8x128xf32>,
    %70 = arith.index_cast %63 : i32 to index
    %c0_30 = arith.constant 0 : index
    %c0_31 = arith.constant 0 : index
    %71 = vector.load %arg2[%70, %c0_30, %c0_31] : memref<8x8x128xf32, #tpu.memory_space<vmem>>, vector<1x8x128xf32>
    %72 = vector.shape_cast %71 : vector<1x8x128xf32> to vector<8x128xf32>
    %cst_32 = arith.constant 1.100000e+00 : f32
    %73 = vector.broadcast %cst_32 : f32 to vector<8x128xf32>
    %74 = arith.mulf %73, %55 : vector<8x128xf32>
    %75 = arith.mulf %55, %55 : vector<8x128xf32>
    %76 = arith.mulf %75, %55 : vector<8x128xf32>
    %cst_33 = arith.constant 0.0333333351 : f32
    %77 = vector.broadcast %cst_33 : f32 to vector<8x128xf32>
    %78 = arith.mulf %77, %76 : vector<8x128xf32>
    %79 = arith.subf %74, %78 : vector<8x128xf32>
    %80 = arith.subf %72, %62 : vector<8x128xf32>
    %cst_34 = arith.constant 1.000000e-01 : f32
    %81 = vector.broadcast %cst_34 : f32 to vector<8x128xf32>
    %82 = arith.mulf %81, %80 : vector<8x128xf32>
    %83 = arith.addf %79, %82 : vector<8x128xf32>
    %cst_35 = arith.constant 9.936000e-01 : f32
    %84 = vector.broadcast %cst_35 : f32 to vector<8x128xf32>
    %85 = arith.mulf %84, %62 : vector<8x128xf32>
    %cst_36 = arith.constant 8.000000e-03 : f32
    %86 = vector.broadcast %cst_36 : f32 to vector<8x128xf32>
    %87 = arith.mulf %86, %55 : vector<8x128xf32>
    %88 = arith.addf %85, %87 : vector<8x128xf32>
    %cst_37 = arith.constant 5.600000e-03 : f32
    %89 = vector.broadcast %cst_37 : f32 to vector<8x128xf32>
    %90 = arith.addf %88, %89 : vector<8x128xf32>
    %c3_i32 = arith.constant 3 : i32
    %91 = arith.addi %6, %c3_i32 : i32
    %cst_38 = arith.constant 5.000000e-01 : f32
    %92 = vector.broadcast %cst_38 : f32 to vector<8x128xf32>
    %93 = arith.mulf %83, %92 : vector<8x128xf32>
    %94 = arith.index_cast %91 : i32 to index
    %c0_39 = arith.constant 0 : index
    %c0_40 = arith.constant 0 : index
    %95 = vector.load %arg3[%94, %c0_39, %c0_40] : memref<8x8x128xf32, #tpu.memory_space<vmem>>, vector<1x8x128xf32>
    %96 = vector.shape_cast %95 : vector<1x8x128xf32> to vector<8x128xf32>
    %97 = vector.shape_cast %93 : vector<8x128xf32> to vector<1x8x128xf32>
    tpu.vector_store %arg3[%94, %c0_39, %c0_40], %97 {strides = array<i32>} : memref<8x8x128xf32, #tpu.memory_space<vmem>>, vector<1x8x128xf32>,
    %98 = arith.index_cast %91 : i32 to index
    %c0_41 = arith.constant 0 : index
    %c0_42 = arith.constant 0 : index
    %99 = vector.load %arg2[%98, %c0_41, %c0_42] : memref<8x8x128xf32, #tpu.memory_space<vmem>>, vector<1x8x128xf32>
    %100 = vector.shape_cast %99 : vector<1x8x128xf32> to vector<8x128xf32>
    %cst_43 = arith.constant 1.100000e+00 : f32
    %101 = vector.broadcast %cst_43 : f32 to vector<8x128xf32>
    %102 = arith.mulf %101, %83 : vector<8x128xf32>
    %103 = arith.mulf %83, %83 : vector<8x128xf32>
    %104 = arith.mulf %103, %83 : vector<8x128xf32>
    %cst_44 = arith.constant 0.0333333351 : f32
    %105 = vector.broadcast %cst_44 : f32 to vector<8x128xf32>
    %106 = arith.mulf %105, %104 : vector<8x128xf32>
    %107 = arith.subf %102, %106 : vector<8x128xf32>
    %108 = arith.subf %100, %90 : vector<8x128xf32>
    %cst_45 = arith.constant 1.000000e-01 : f32
    %109 = vector.broadcast %cst_45 : f32 to vector<8x128xf32>
    %110 = arith.mulf %109, %108 : vector<8x128xf32>
    %111 = arith.addf %107, %110 : vector<8x128xf32>
    %cst_46 = arith.constant 9.936000e-01 : f32
    %112 = vector.broadcast %cst_46 : f32 to vector<8x128xf32>
    %113 = arith.mulf %112, %90 : vector<8x128xf32>
    %cst_47 = arith.constant 8.000000e-03 : f32
    %114 = vector.broadcast %cst_47 : f32 to vector<8x128xf32>
    %115 = arith.mulf %114, %83 : vector<8x128xf32>
    %116 = arith.addf %113, %115 : vector<8x128xf32>
    %cst_48 = arith.constant 5.600000e-03 : f32
    %117 = vector.broadcast %cst_48 : f32 to vector<8x128xf32>
    %118 = arith.addf %116, %117 : vector<8x128xf32>
    %c4_i32 = arith.constant 4 : i32
    %119 = arith.addi %6, %c4_i32 : i32
    %cst_49 = arith.constant 5.000000e-01 : f32
    %120 = vector.broadcast %cst_49 : f32 to vector<8x128xf32>
    %121 = arith.mulf %111, %120 : vector<8x128xf32>
    %122 = arith.index_cast %119 : i32 to index
    %c0_50 = arith.constant 0 : index
    %c0_51 = arith.constant 0 : index
    %123 = vector.load %arg3[%122, %c0_50, %c0_51] : memref<8x8x128xf32, #tpu.memory_space<vmem>>, vector<1x8x128xf32>
    %124 = vector.shape_cast %123 : vector<1x8x128xf32> to vector<8x128xf32>
    %125 = vector.shape_cast %121 : vector<8x128xf32> to vector<1x8x128xf32>
    tpu.vector_store %arg3[%122, %c0_50, %c0_51], %125 {strides = array<i32>} : memref<8x8x128xf32, #tpu.memory_space<vmem>>, vector<1x8x128xf32>,
    %126 = arith.index_cast %119 : i32 to index
    %c0_52 = arith.constant 0 : index
    %c0_53 = arith.constant 0 : index
    %127 = vector.load %arg2[%126, %c0_52, %c0_53] : memref<8x8x128xf32, #tpu.memory_space<vmem>>, vector<1x8x128xf32>
    %128 = vector.shape_cast %127 : vector<1x8x128xf32> to vector<8x128xf32>
    %cst_54 = arith.constant 1.100000e+00 : f32
    %129 = vector.broadcast %cst_54 : f32 to vector<8x128xf32>
    %130 = arith.mulf %129, %111 : vector<8x128xf32>
    %131 = arith.mulf %111, %111 : vector<8x128xf32>
    %132 = arith.mulf %131, %111 : vector<8x128xf32>
    %cst_55 = arith.constant 0.0333333351 : f32
    %133 = vector.broadcast %cst_55 : f32 to vector<8x128xf32>
    %134 = arith.mulf %133, %132 : vector<8x128xf32>
    %135 = arith.subf %130, %134 : vector<8x128xf32>
    %136 = arith.subf %128, %118 : vector<8x128xf32>
    %cst_56 = arith.constant 1.000000e-01 : f32
    %137 = vector.broadcast %cst_56 : f32 to vector<8x128xf32>
    %138 = arith.mulf %137, %136 : vector<8x128xf32>
    %139 = arith.addf %135, %138 : vector<8x128xf32>
    %cst_57 = arith.constant 9.936000e-01 : f32
    %140 = vector.broadcast %cst_57 : f32 to vector<8x128xf32>
    %141 = arith.mulf %140, %118 : vector<8x128xf32>
    %cst_58 = arith.constant 8.000000e-03 : f32
    %142 = vector.broadcast %cst_58 : f32 to vector<8x128xf32>
    %143 = arith.mulf %142, %111 : vector<8x128xf32>
    %144 = arith.addf %141, %143 : vector<8x128xf32>
    %cst_59 = arith.constant 5.600000e-03 : f32
    %145 = vector.broadcast %cst_59 : f32 to vector<8x128xf32>
    %146 = arith.addf %144, %145 : vector<8x128xf32>
    %c5_i32 = arith.constant 5 : i32
    %147 = arith.addi %6, %c5_i32 : i32
    %cst_60 = arith.constant 5.000000e-01 : f32
    %148 = vector.broadcast %cst_60 : f32 to vector<8x128xf32>
    %149 = arith.mulf %139, %148 : vector<8x128xf32>
    %150 = arith.index_cast %147 : i32 to index
    %c0_61 = arith.constant 0 : index
    %c0_62 = arith.constant 0 : index
    %151 = vector.load %arg3[%150, %c0_61, %c0_62] : memref<8x8x128xf32, #tpu.memory_space<vmem>>, vector<1x8x128xf32>
    %152 = vector.shape_cast %151 : vector<1x8x128xf32> to vector<8x128xf32>
    %153 = vector.shape_cast %149 : vector<8x128xf32> to vector<1x8x128xf32>
    tpu.vector_store %arg3[%150, %c0_61, %c0_62], %153 {strides = array<i32>} : memref<8x8x128xf32, #tpu.memory_space<vmem>>, vector<1x8x128xf32>,
    %154 = arith.index_cast %147 : i32 to index
    %c0_63 = arith.constant 0 : index
    %c0_64 = arith.constant 0 : index
    %155 = vector.load %arg2[%154, %c0_63, %c0_64] : memref<8x8x128xf32, #tpu.memory_space<vmem>>, vector<1x8x128xf32>
    %156 = vector.shape_cast %155 : vector<1x8x128xf32> to vector<8x128xf32>
    %cst_65 = arith.constant 1.100000e+00 : f32
    %157 = vector.broadcast %cst_65 : f32 to vector<8x128xf32>
    %158 = arith.mulf %157, %139 : vector<8x128xf32>
    %159 = arith.mulf %139, %139 : vector<8x128xf32>
    %160 = arith.mulf %159, %139 : vector<8x128xf32>
    %cst_66 = arith.constant 0.0333333351 : f32
    %161 = vector.broadcast %cst_66 : f32 to vector<8x128xf32>
    %162 = arith.mulf %161, %160 : vector<8x128xf32>
    %163 = arith.subf %158, %162 : vector<8x128xf32>
    %164 = arith.subf %156, %146 : vector<8x128xf32>
    %cst_67 = arith.constant 1.000000e-01 : f32
    %165 = vector.broadcast %cst_67 : f32 to vector<8x128xf32>
    %166 = arith.mulf %165, %164 : vector<8x128xf32>
    %167 = arith.addf %163, %166 : vector<8x128xf32>
    %cst_68 = arith.constant 9.936000e-01 : f32
    %168 = vector.broadcast %cst_68 : f32 to vector<8x128xf32>
    %169 = arith.mulf %168, %146 : vector<8x128xf32>
    %cst_69 = arith.constant 8.000000e-03 : f32
    %170 = vector.broadcast %cst_69 : f32 to vector<8x128xf32>
    %171 = arith.mulf %170, %139 : vector<8x128xf32>
    %172 = arith.addf %169, %171 : vector<8x128xf32>
    %cst_70 = arith.constant 5.600000e-03 : f32
    %173 = vector.broadcast %cst_70 : f32 to vector<8x128xf32>
    %174 = arith.addf %172, %173 : vector<8x128xf32>
    %c6_i32 = arith.constant 6 : i32
    %175 = arith.addi %6, %c6_i32 : i32
    %cst_71 = arith.constant 5.000000e-01 : f32
    %176 = vector.broadcast %cst_71 : f32 to vector<8x128xf32>
    %177 = arith.mulf %167, %176 : vector<8x128xf32>
    %178 = arith.index_cast %175 : i32 to index
    %c0_72 = arith.constant 0 : index
    %c0_73 = arith.constant 0 : index
    %179 = vector.load %arg3[%178, %c0_72, %c0_73] : memref<8x8x128xf32, #tpu.memory_space<vmem>>, vector<1x8x128xf32>
    %180 = vector.shape_cast %179 : vector<1x8x128xf32> to vector<8x128xf32>
    %181 = vector.shape_cast %177 : vector<8x128xf32> to vector<1x8x128xf32>
    tpu.vector_store %arg3[%178, %c0_72, %c0_73], %181 {strides = array<i32>} : memref<8x8x128xf32, #tpu.memory_space<vmem>>, vector<1x8x128xf32>,
    %182 = arith.index_cast %175 : i32 to index
    %c0_74 = arith.constant 0 : index
    %c0_75 = arith.constant 0 : index
    %183 = vector.load %arg2[%182, %c0_74, %c0_75] : memref<8x8x128xf32, #tpu.memory_space<vmem>>, vector<1x8x128xf32>
    %184 = vector.shape_cast %183 : vector<1x8x128xf32> to vector<8x128xf32>
    %cst_76 = arith.constant 1.100000e+00 : f32
    %185 = vector.broadcast %cst_76 : f32 to vector<8x128xf32>
    %186 = arith.mulf %185, %167 : vector<8x128xf32>
    %187 = arith.mulf %167, %167 : vector<8x128xf32>
    %188 = arith.mulf %187, %167 : vector<8x128xf32>
    %cst_77 = arith.constant 0.0333333351 : f32
    %189 = vector.broadcast %cst_77 : f32 to vector<8x128xf32>
    %190 = arith.mulf %189, %188 : vector<8x128xf32>
    %191 = arith.subf %186, %190 : vector<8x128xf32>
    %192 = arith.subf %184, %174 : vector<8x128xf32>
    %cst_78 = arith.constant 1.000000e-01 : f32
    %193 = vector.broadcast %cst_78 : f32 to vector<8x128xf32>
    %194 = arith.mulf %193, %192 : vector<8x128xf32>
    %195 = arith.addf %191, %194 : vector<8x128xf32>
    %cst_79 = arith.constant 9.936000e-01 : f32
    %196 = vector.broadcast %cst_79 : f32 to vector<8x128xf32>
    %197 = arith.mulf %196, %174 : vector<8x128xf32>
    %cst_80 = arith.constant 8.000000e-03 : f32
    %198 = vector.broadcast %cst_80 : f32 to vector<8x128xf32>
    %199 = arith.mulf %198, %167 : vector<8x128xf32>
    %200 = arith.addf %197, %199 : vector<8x128xf32>
    %cst_81 = arith.constant 5.600000e-03 : f32
    %201 = vector.broadcast %cst_81 : f32 to vector<8x128xf32>
    %202 = arith.addf %200, %201 : vector<8x128xf32>
    %c7_i32 = arith.constant 7 : i32
    %203 = arith.addi %6, %c7_i32 : i32
    %cst_82 = arith.constant 5.000000e-01 : f32
    %204 = vector.broadcast %cst_82 : f32 to vector<8x128xf32>
    %205 = arith.mulf %195, %204 : vector<8x128xf32>
    %206 = arith.index_cast %203 : i32 to index
    %c0_83 = arith.constant 0 : index
    %c0_84 = arith.constant 0 : index
    %207 = vector.load %arg3[%206, %c0_83, %c0_84] : memref<8x8x128xf32, #tpu.memory_space<vmem>>, vector<1x8x128xf32>
    %208 = vector.shape_cast %207 : vector<1x8x128xf32> to vector<8x128xf32>
    %209 = vector.shape_cast %205 : vector<8x128xf32> to vector<1x8x128xf32>
    tpu.vector_store %arg3[%206, %c0_83, %c0_84], %209 {strides = array<i32>} : memref<8x8x128xf32, #tpu.memory_space<vmem>>, vector<1x8x128xf32>,
    %210 = arith.index_cast %203 : i32 to index
    %c0_85 = arith.constant 0 : index
    %c0_86 = arith.constant 0 : index
    %211 = vector.load %arg2[%210, %c0_85, %c0_86] : memref<8x8x128xf32, #tpu.memory_space<vmem>>, vector<1x8x128xf32>
    %212 = vector.shape_cast %211 : vector<1x8x128xf32> to vector<8x128xf32>
    %cst_87 = arith.constant 1.100000e+00 : f32
    %213 = vector.broadcast %cst_87 : f32 to vector<8x128xf32>
    %214 = arith.mulf %213, %195 : vector<8x128xf32>
    %215 = arith.mulf %195, %195 : vector<8x128xf32>
    %216 = arith.mulf %215, %195 : vector<8x128xf32>
    %cst_88 = arith.constant 0.0333333351 : f32
    %217 = vector.broadcast %cst_88 : f32 to vector<8x128xf32>
    %218 = arith.mulf %217, %216 : vector<8x128xf32>
    %219 = arith.subf %214, %218 : vector<8x128xf32>
    %220 = arith.subf %212, %202 : vector<8x128xf32>
    %cst_89 = arith.constant 1.000000e-01 : f32
    %221 = vector.broadcast %cst_89 : f32 to vector<8x128xf32>
    %222 = arith.mulf %221, %220 : vector<8x128xf32>
    %223 = arith.addf %219, %222 : vector<8x128xf32>
    %cst_90 = arith.constant 9.936000e-01 : f32
    %224 = vector.broadcast %cst_90 : f32 to vector<8x128xf32>
    %225 = arith.mulf %224, %202 : vector<8x128xf32>
    %cst_91 = arith.constant 8.000000e-03 : f32
    %226 = vector.broadcast %cst_91 : f32 to vector<8x128xf32>
    %227 = arith.mulf %226, %195 : vector<8x128xf32>
    %228 = arith.addf %225, %227 : vector<8x128xf32>
    %cst_92 = arith.constant 5.600000e-03 : f32
    %229 = vector.broadcast %cst_92 : f32 to vector<8x128xf32>
    %230 = arith.addf %228, %229 : vector<8x128xf32>
    %c1_i32_93 = arith.constant 1 : i32
    %c0_94 = arith.constant 0 : index
    %c0_95 = arith.constant 0 : index
    %231 = vector.load %arg4[%c0_94, %c0_95] : memref<8x128xf32, #tpu.memory_space<vmem>>, vector<8x128xf32>
    tpu.vector_store %arg4[%c0_94, %c0_95], %223 {strides = array<i32>} : memref<8x128xf32, #tpu.memory_space<vmem>>, vector<8x128xf32>,
    %c0_96 = arith.constant 0 : index
    %c0_97 = arith.constant 0 : index
    %232 = vector.load %arg5[%c0_96, %c0_97] : memref<8x128xf32, #tpu.memory_space<vmem>>, vector<8x128xf32>
    tpu.vector_store %arg5[%c0_96, %c0_97], %230 {strides = array<i32>} : memref<8x128xf32, #tpu.memory_space<vmem>>, vector<8x128xf32>,
    return
  }
  func.func @transform_0(%arg0: i32, %arg1: i32) -> (i32, i32, i32) {
    %c0_i32 = arith.constant 0 : i32
    %c0_i32_0 = arith.constant 0 : i32
    return %arg1, %arg0, %c0_i32 : i32, i32, i32
  }
  func.func @transform_1(%arg0: i32, %arg1: i32) -> (i32, i32, i32) {
    %c0_i32 = arith.constant 0 : i32
    %c0_i32_0 = arith.constant 0 : i32
    return %arg1, %arg0, %c0_i32 : i32, i32, i32
  }
}

</mosaic_0001>

<llo_original>
// kernel: fh_forward.1
$region0: #{fh_forward.1}
  #allocation0 [shape = 'u32[]', space=smem, size = 0x4, offset = 0x4, fixed_abs, tag = 'smem constant byte address 0x4 - core index']
  #allocation1 [shape = 'u32[144,128]{1,0:T(1,128)}', space=vmem, size = 0x12000, scoped, tag = 'internal scratch']
  #allocation2 [shape = 'f32[8,128]{1,0:T(8,128)}', space=vmem, size = 0x1000, scoped, tag = 'scratch operand']
  #allocation3 [shape = 'f32[8,128]{1,0:T(8,128)}', space=vmem, size = 0x1000, scoped, tag = 'scratch operand']
  %s0 = inlined_call_operand.vmem [shape: f32[8,8,128], index: 0, kind: input, shape index: {}]
  %s1 = inlined_call_operand.vmem [shape: f32[8,8,128], index: 1, kind: output, shape index: {}]
  %s2 = sld [smem:[#allocation0]]
  $region18: #{fh_forward.1} parent=0
    _
  %s4 = ssub.s32 1, %s2
  %s5 = scalar_select 0, %s4, %s2
  // Predicated region
  $region2: #{fh_forward.1} parent=0 // pred_check
    _
  $region3: #{fh_forward.1} parent=0 // pred_check_branch
    %7 = sbr.rel (0) target = $region5
  $region4: #{fh_forward.1} parent=0 // pred_region
    _
  $region5: #{fh_forward.1} parent=0 // pred_fallthru
    _
  %p8 = scmp.eq.s32.totalorder 0, 0
  // Predicated region
  $region6: #{fh_forward.1} parent=0 // pred_check
    %p9 = pneg %p8
  $region7: #{fh_forward.1} parent=0 // pred_check_branch
    %11 = sbr.rel (%p9) target = $region9
  $region8: #{fh_forward.1} parent=0 // pred_region
    %12 = vst [vmem:[#allocation2] sm:$0xff] 0.0
    %13 = vst [vmem:[#allocation3] sm:$0xff] 0.0
  $region9: #{fh_forward.1} parent=0 // pred_fallthru
    _
  %v14 = vld [vmem:[#allocation2] sm:$0xff]
  %v15 = vld [vmem:[#allocation3] sm:$0xff]
  %v16 = vmul.f32 %v14, 0.5
  %s17 = smul.u32 0, 8
  %s18 = scalar_lea.vmem %s1, %s17
  %19 = vst [vmem:[%s18] sm:$0xff] %v16
  %s20 = scalar_lea.vmem %s0, %s17
  %v21 = vld [vmem:[%s20] sm:$0xff]
  %v22 = vmul.f32 %v14, 1.1
  %v23 = vmul.f32 %v14, %v14
  %v24 = vmul.f32 %v23, %v14
  %v25 = vmul.f32 %v24, 0.033333335
  %v26 = vsub.f32 %v22, %v25
  %v27 = vsub.f32 %v21, %v15
  %v28 = vmul.f32 %v27, 0.1
  %v29 = vadd.f32 %v26, %v28
  %v30 = vmul.f32 %v15, 0.9936
  %v31 = vmul.f32 %v14, 0.008
  %v32 = vadd.f32 %v30, %v31
  %v33 = vadd.f32 %v32, 0.0056
  %s34 = sadd.s32 0, 1
  %v35 = vmul.f32 %v29, 0.5
  %s36 = smul.u32 %s34, 8
  %s37 = scalar_lea.vmem %s1, %s36
  %38 = vst [vmem:[%s37] sm:$0xff] %v35
  %s39 = scalar_lea.vmem %s0, %s36
  %v40 = vld [vmem:[%s39] sm:$0xff]
  %v41 = vmul.f32 %v29, 1.1
  %v42 = vmul.f32 %v29, %v29
  %v43 = vmul.f32 %v42, %v29
  %v44 = vmul.f32 %v43, 0.033333335
  %v45 = vsub.f32 %v41, %v44
  %v46 = vsub.f32 %v40, %v33
  %v47 = vmul.f32 %v46, 0.1
  %v48 = vadd.f32 %v45, %v47
  %v49 = vmul.f32 %v33, 0.9936
  %v50 = vmul.f32 %v29, 0.008
  %v51 = vadd.f32 %v49, %v50
  %v52 = vadd.f32 %v51, 0.0056
  %s53 = sadd.s32 0, 2
  %v54 = vmul.f32 %v48, 0.5
  %s55 = smul.u32 %s53, 8
  %s56 = scalar_lea.vmem %s1, %s55
  %57 = vst [vmem:[%s56] sm:$0xff] %v54
  %s58 = scalar_lea.vmem %s0, %s55
  %v59 = vld [vmem:[%s58] sm:$0xff]
  %v60 = vmul.f32 %v48, 1.1
  %v61 = vmul.f32 %v48, %v48
  %v62 = vmul.f32 %v61, %v48
  %v63 = vmul.f32 %v62, 0.033333335
  %v64 = vsub.f32 %v60, %v63
  %v65 = vsub.f32 %v59, %v52
  %v66 = vmul.f32 %v65, 0.1
  %v67 = vadd.f32 %v64, %v66
  %v68 = vmul.f32 %v52, 0.9936
  %v69 = vmul.f32 %v48, 0.008
  %v70 = vadd.f32 %v68, %v69
  %v71 = vadd.f32 %v70, 0.0056
  %s72 = sadd.s32 0, 3
  %v73 = vmul.f32 %v67, 0.5
  %s74 = smul.u32 %s72, 8
  %s75 = scalar_lea.vmem %s1, %s74
  %76 = vst [vmem:[%s75] sm:$0xff] %v73
  %s77 = scalar_lea.vmem %s0, %s74
  %v78 = vld [vmem:[%s77] sm:$0xff]
  %v79 = vmul.f32 %v67, 1.1
  %v80 = vmul.f32 %v67, %v67
  %v81 = vmul.f32 %v80, %v67
  %v82 = vmul.f32 %v81, 0.033333335
  %v83 = vsub.f32 %v79, %v82
  %v84 = vsub.f32 %v78, %v71
  %v85 = vmul.f32 %v84, 0.1
  %v86 = vadd.f32 %v83, %v85
  %v87 = vmul.f32 %v71, 0.9936
  %v88 = vmul.f32 %v67, 0.008
  %v89 = vadd.f32 %v87, %v88
  %v90 = vadd.f32 %v89, 0.0056
  %s91 = sadd.s32 0, 4
  %v92 = vmul.f32 %v86, 0.5
  %s93 = smul.u32 %s91, 8
  %s94 = scalar_lea.vmem %s1, %s93
  %95 = vst [vmem:[%s94] sm:$0xff] %v92
  %s96 = scalar_lea.vmem %s0, %s93
  %v97 = vld [vmem:[%s96] sm:$0xff]
  %v98 = vmul.f32 %v86, 1.1
  %v99 = vmul.f32 %v86, %v86
  %v100 = vmul.f32 %v99, %v86
  %v101 = vmul.f32 %v100, 0.033333335
  %v102 = vsub.f32 %v98, %v101
  %v103 = vsub.f32 %v97, %v90
  %v104 = vmul.f32 %v103, 0.1
  %v105 = vadd.f32 %v102, %v104
  %v106 = vmul.f32 %v90, 0.9936
  %v107 = vmul.f32 %v86, 0.008
  %v108 = vadd.f32 %v106, %v107
  %v109 = vadd.f32 %v108, 0.0056
  %s110 = sadd.s32 0, 5
  %v111 = vmul.f32 %v105, 0.5
  %s112 = smul.u32 %s110, 8
  %s113 = scalar_lea.vmem %s1, %s112
  %114 = vst [vmem:[%s113] sm:$0xff] %v111
  %s115 = scalar_lea.vmem %s0, %s112
  %v116 = vld [vmem:[%s115] sm:$0xff]
  %v117 = vmul.f32 %v105, 1.1
  %v118 = vmul.f32 %v105, %v105
  %v119 = vmul.f32 %v118, %v105
  %v120 = vmul.f32 %v119, 0.033333335
  %v121 = vsub.f32 %v117, %v120
  %v122 = vsub.f32 %v116, %v109
  %v123 = vmul.f32 %v122, 0.1
  %v124 = vadd.f32 %v121, %v123
  %v125 = vmul.f32 %v109, 0.9936
  %v126 = vmul.f32 %v105, 0.008
  %v127 = vadd.f32 %v125, %v126
  %v128 = vadd.f32 %v127, 0.0056
  %s129 = sadd.s32 0, 6
  %v130 = vmul.f32 %v124, 0.5
  %s131 = smul.u32 %s129, 8
  %s132 = scalar_lea.vmem %s1, %s131
  %133 = vst [vmem:[%s132] sm:$0xff] %v130
  %s134 = scalar_lea.vmem %s0, %s131
  %v135 = vld [vmem:[%s134] sm:$0xff]
  %v136 = vmul.f32 %v124, 1.1
  %v137 = vmul.f32 %v124, %v124
  %v138 = vmul.f32 %v137, %v124
  %v139 = vmul.f32 %v138, 0.033333335
  %v140 = vsub.f32 %v136, %v139
  %v141 = vsub.f32 %v135, %v128
  %v142 = vmul.f32 %v141, 0.1
  %v143 = vadd.f32 %v140, %v142
  %v144 = vmul.f32 %v128, 0.9936
  %v145 = vmul.f32 %v124, 0.008
  %v146 = vadd.f32 %v144, %v145
  %v147 = vadd.f32 %v146, 0.0056
  %s148 = sadd.s32 0, 7
  %v149 = vmul.f32 %v143, 0.5
  %s150 = smul.u32 %s148, 8
  %s151 = scalar_lea.vmem %s1, %s150
  %152 = vst [vmem:[%s151] sm:$0xff] %v149
  %s153 = scalar_lea.vmem %s0, %s150
  %v154 = vld [vmem:[%s153] sm:$0xff]
  %v155 = vmul.f32 %v143, 1.1
  %v156 = vmul.f32 %v143, %v143
  %v157 = vmul.f32 %v156, %v143
  %v158 = vmul.f32 %v157, 0.033333335
  %v159 = vsub.f32 %v155, %v158
  %v160 = vsub.f32 %v154, %v147
  %v161 = vmul.f32 %v160, 0.1
  %v162 = vadd.f32 %v159, %v161
  %v163 = vmul.f32 %v147, 0.9936
  %v164 = vmul.f32 %v143, 0.008
  %v165 = vadd.f32 %v163, %v164
  %v166 = vadd.f32 %v165, 0.0056
  %167 = vst [vmem:[#allocation2] sm:$0xff] %v162
  %168 = vst [vmem:[#allocation3] sm:$0xff] %v166
  // Predicated region
  $region10: #{fh_forward.1} parent=0 // pred_check
    _
  $region11: #{fh_forward.1} parent=0 // pred_check_branch
    %170 = sbr.rel (0) target = $region13
  $region12: #{fh_forward.1} parent=0 // pred_region
    _
  $region13: #{fh_forward.1} parent=0 // pred_fallthru
    _
  // Predicated region
  $region14: #{fh_forward.1} parent=0 // pred_check
    _
  $region15: #{fh_forward.1} parent=0 // pred_check_branch
    %172 = sbr.rel (0) target = $region17
  $region16: #{fh_forward.1} parent=0 // pred_region
    _
  $region17: #{fh_forward.1} parent=0 // pred_fallthru
    _

</llo_original>
